<compile_context>
chip_gen: v7x
topology: tpu7x:2x2x1
jax: 0.10.0
libtpu: 0.0.40
codegen_flags: <defaults>
</compile_context>

<pallas_src>
import jax
import jax.numpy as jnp
from jax.experimental import pallas as pl
from jax.experimental.pallas import tpu as pltpu


_MIB = 1024 * 1024
_TIME_TILE_CANDIDATES = (4096, 2048, 1024, 512, 256, 128)


# ---------------------------------------------------------------------------
# Kernel
# ---------------------------------------------------------------------------

def _pw_conv_kernel(w_ref, b_ref, x_ref, o_ref):
    # w_ref: (c_out_t, C_in)    weight tile (MXU LHS), resident across inner grid axes
    # b_ref: (c_out_t, 1)       bias tile, pre-cast to f32 in the wrapper
    # x_ref: (nb, C_in, tT)     nb batch elements of one NCT time tile
    # o_ref: (nb, c_out_t, tT)  lane-dense output tile
    w = w_ref[...]
    bias = b_ref[...]
    for i in range(x_ref.shape[0]):     # nb is a tiny static block factor (<= 8): unrolled
        acc = jnp.dot(w, x_ref[i], preferred_element_type=jnp.float32)
        o_ref[i] = (acc + bias).astype(o_ref.dtype)


# ---------------------------------------------------------------------------
# Tiling heuristics
# ---------------------------------------------------------------------------

def _vmem_capacity_bytes():
    """Per-core VMEM capacity; conservative 64 MiB fallback (v7x) if the query fails."""
    try:
        cap = getattr(pltpu.get_tpu_info(), "vmem_capacity_bytes", None)
        if cap:
            return int(cap)
    except Exception:
        pass
    return 64 * _MIB


def _pick_time_tile(T, per_col_bytes, budget_bytes):
    """Largest lane-aligned (multiple-of-128) time tile fitting the double-buffered budget."""
    if T <= 256:
        return T                                    # tiny T: one full-T block (always legal)
    max_cols = max(128, budget_bytes // per_col_bytes)
    t_pad = ((T + 127) // 128) * 128                # T rounded up to a lane multiple
    for cand in _TIME_TILE_CANDIDATES:
        if cand <= max_cols:
            return min(cand, t_pad)
    return 128


def _pick_batch_block(B, n_t, per_batch_bytes, budget_bytes):
    """Block several batch elements per step when T fits in a single time tile."""
    if n_t != 1 or B <= 1:
        return 1
    for cand in (8, 4, 2):
        if cand <= B and cand * per_batch_bytes <= budget_bytes:
            return cand
    return 1


# ---------------------------------------------------------------------------
# Wrapper
# ---------------------------------------------------------------------------

def pointwise_conv1d(x, weight, bias):
    """Pointwise 1-D convolution (kernel_size=1, stride=1, padding=0).

    Args:
      x:      (B, C_in, T)      -- PyTorch nn.Conv1d input layout (NCT).
      weight: (C_out, C_in, 1)  -- PyTorch Conv1d weight layout.
      bias:   (C_out,)
    Returns:
      (B, C_out, T), same dtype as x.
    """
    B, C_in, T = x.shape
    C_out = weight.shape[0]
    x_item = jnp.dtype(x.dtype).itemsize
    w_item = jnp.dtype(weight.dtype).itemsize

    w2d = weight[:, :, 0]                              # (C_out, C_in): already MXU-LHS layout
    b2d = bias.astype(jnp.float32).reshape(C_out, 1)   # pre-cast bias once, in the wrapper

    # ---- generation-aware VMEM limit (96 MiB on v5e/v6e, 48 MiB on v7x) ----
    vmem_limit = int(min((_vmem_capacity_bytes() * 3) // 4, 96 * _MIB))

    # ---- C_out tiling: only assume full-weight residency when it is cheap ----
    if C_out * C_in * w_item > 8 * _MIB and C_out > 256:
        c_out_t = 256                                  # multiple of 8 -> partial last block OK
    else:
        c_out_t = C_out
    n_cout = pl.cdiv(C_out, c_out_t)

    w_tile_bytes = c_out_t * C_in * w_item
    single_buffer_wb = w_tile_bytes >= _MIB            # Buffered(1) only when it frees real VMEM
    w_bufs = 1 if single_buffer_wb else 2
    reserved = w_bufs * (w_tile_bytes + c_out_t * 4) + 2 * _MIB
    tile_budget = max(4 * _MIB, vmem_limit - reserved)

    # ---- time tiling (cdiv grid; padded last block handles unaligned T) ----
    per_col = 2 * (C_in + c_out_t) * x_item            # double-buffered x + out bytes / column
    tT = _pick_time_tile(T, per_col, tile_budget)
    n_t = pl.cdiv(T, tT)

    # ---- batch blocking for the small-T / large-B regime ----
    per_batch = 2 * (C_in + c_out_t) * tT * x_item
    nb = _pick_batch_block(B, n_t, per_batch, tile_budget)
    n_b = pl.cdiv(B, nb)

    # ---- grid ordering: weight axis outermost; larger data axis next (megacore balance) ----
    if n_b >= n_t:
        grid = (n_cout, n_b, n_t)
        w_map = lambda c, b, t: (c, 0)
        x_map = lambda c, b, t: (b, 0, t)
        o_map = lambda c, b, t: (b, c, t)
    else:
        grid = (n_cout, n_t, n_b)
        w_map = lambda c, t, b: (c, 0)
        x_map = lambda c, t, b: (b, 0, t)
        o_map = lambda c, t, b: (b, c, t)

    wb_kwargs = dict(pipeline_mode=pl.Buffered(1)) if single_buffer_wb else {}

    return pl.pallas_call(
        _pw_conv_kernel,
        out_shape=jax.ShapeDtypeStruct((B, C_out, T), x.dtype),
        grid_spec=pltpu.PrefetchScalarGridSpec(
            num_scalar_prefetch=0,
            grid=grid,
            in_specs=[
                pl.BlockSpec((c_out_t, C_in), w_map, **wb_kwargs),   # weight tile (resident)
                pl.BlockSpec((c_out_t, 1), w_map, **wb_kwargs),      # bias tile (resident)
                pl.BlockSpec((nb, C_in, tT), x_map),                 # activation block (NCT)
            ],
            out_specs=pl.BlockSpec((nb, c_out_t, tT), o_map),
        ),
        compiler_params=pltpu.CompilerParams(
            dimension_semantics=("parallel", "parallel", "parallel"),
            vmem_limit_bytes=vmem_limit,
        ),
    )(w2d, b2d, x)


def init_pointwise_conv1d_params(key, in_channels, out_channels, dtype=jnp.float32):
    """Deterministic init mimicking nn.Conv1d default (kaiming-uniform-ish bounds)."""
    kw, kb = jax.random.split(key)
    fan_in = in_channels * 1  # kernel_size = 1
    bound = 1.0 / (fan_in ** 0.5)
    weight = jax.random.uniform(kw, (out_channels, in_channels, 1),
                                minval=-bound, maxval=bound, dtype=dtype)
    bias = jax.random.uniform(kb, (out_channels,),
                              minval=-bound, maxval=bound, dtype=dtype)
    return weight, bias


def _reference(x, weight, bias):
    return jnp.einsum("oc,bct->bot", weight[:, :, 0], x,
                      precision=jax.lax.Precision.HIGHEST) + bias[None, :, None]


if __name__ == "__main__":
    key = jax.random.PRNGKey(0)
    k1, k2, k3, k4, k5, k6 = jax.random.split(key, 6)

    # --- 1. Small module-sized demo (tiny channels, batch-blocked path) ---
    B, C_in, C_out, T = 2, 4, 8, 16
    x = jax.random.normal(k1, (B, C_in, T), dtype=jnp.float32)
    weight, bias = init_pointwise_conv1d_params(k2, C_in, C_out)
    out = jax.block_until_ready(pointwise_conv1d(x, weight, bias))
    assert out.shape == (B, C_out, T)
    assert jnp.allclose(out, _reference(x, weight, bias), atol=1e-4, rtol=1e-4)

    # --- 2. Unaligned T and non-dividing batch block (partial-block path) ---
    B1, C_in1, C_out1, T1 = 3, 16, 24, 200
    x1 = jax.random.normal(k3, (B1, C_in1, T1), dtype=jnp.float32)
    w1, bi1 = init_pointwise_conv1d_params(k4, C_in1, C_out1)
    out1 = jax.block_until_ready(pointwise_conv1d(x1, w1, bi1))
    assert out1.shape == (B1, C_out1, T1)
    assert jnp.allclose(out1, _reference(x1, w1, bi1), atol=1e-3, rtol=1e-3)

    # --- 3. Lane-aligned shapes (tiled MXU path) ---
    B2, C_in2, C_out2, T2 = 2, 128, 256, 512
    x2 = jax.random.normal(k5, (B2, C_in2, T2), dtype=jnp.float32)
    w2, b2 = init_pointwise_conv1d_params(k6, C_in2, C_out2)
    out2 = jax.block_until_ready(pointwise_conv1d(x2, w2, b2))
    assert out2.shape == (B2, C_out2, T2)
    assert jnp.allclose(out2, _reference(x2, w2, b2), atol=2e-2, rtol=2e-2)

    print("KERNEL_OK")
</pallas_src>

<mosaic_0001>
module attributes {stable_mosaic.version = 11 : i64} {
  func.func @_pw_conv_kernel(%arg0: i32, %arg1: i32, %arg2: i32, %arg3: memref<8x4xf32, #tpu.memory_space<vmem>>, %arg4: memref<8x1xf32, #tpu.memory_space<vmem>>, %arg5: memref<2x4x16xf32, #tpu.memory_space<vmem>>, %arg6: memref<2x8x16xf32, #tpu.memory_space<vmem>>) attributes {dimension_semantics = [#tpu.dimension_semantics<parallel>, #tpu.dimension_semantics<parallel>, #tpu.dimension_semantics<parallel>], iteration_bounds = array<i64: 1, 1, 1>, scalar_prefetch = 0 : i64, scratch_operands = 0 : i64, tpu.core_type = #tpu.core_type<tc>, window_params = [{transform_indices = @transform_0, window_bounds = array<i64: 8, 4>}, {transform_indices = @transform_1, window_bounds = array<i64: 8, 1>}, {transform_indices = @transform_2, window_bounds = array<i64: 2, 4, 16>}, {transform_indices = @transform_3, window_bounds = array<i64: 2, 8, 16>}]} {
    %c0 = arith.constant 0 : index
    %c0_0 = arith.constant 0 : index
    %0 = vector.load %arg3[%c0, %c0_0] : memref<8x4xf32, #tpu.memory_space<vmem>>, vector<8x4xf32>
    %c0_1 = arith.constant 0 : index
    %c0_2 = arith.constant 0 : index
    %1 = vector.load %arg4[%c0_1, %c0_2] : memref<8x1xf32, #tpu.memory_space<vmem>>, vector<8x1xf32>
    %c0_3 = arith.constant 0 : index
    %c0_4 = arith.constant 0 : index
    %c0_5 = arith.constant 0 : index
    %2 = vector.load %arg5[%c0_3, %c0_4, %c0_5] : memref<2x4x16xf32, #tpu.memory_space<vmem>>, vector<1x4x16xf32>
    %3 = vector.shape_cast %2 : vector<1x4x16xf32> to vector<4x16xf32>
    %cst = arith.constant dense<0.000000e+00> : vector<8x16xf32>
    %4 = tpu.matmul %0, %3, %cst {dimension_numbers = #tpu.dot_dimension_numbers<[1], [0], [0], [1], [0, 0, 1, 1], [], []>} : vector<8x4xf32>, vector<4x16xf32>, vector<8x16xf32> -> vector<8x16xf32>
    %5 = vector.broadcast %1 : vector<8x1xf32> to vector<8x16xf32>
    %6 = arith.addf %4, %5 : vector<8x16xf32>
    %c0_6 = arith.constant 0 : index
    %c0_7 = arith.constant 0 : index
    %c0_8 = arith.constant 0 : index
    %7 = vector.load %arg6[%c0_6, %c0_7, %c0_8] : memref<2x8x16xf32, #tpu.memory_space<vmem>>, vector<1x8x16xf32>
    %8 = vector.shape_cast %7 : vector<1x8x16xf32> to vector<8x16xf32>
    %9 = vector.shape_cast %6 : vector<8x16xf32> to vector<1x8x16xf32>
    tpu.vector_store %arg6[%c0_6, %c0_7, %c0_8], %9 {strides = array<i32>} : memref<2x8x16xf32, #tpu.memory_space<vmem>>, vector<1x8x16xf32>,
    %c1 = arith.constant 1 : index
    %c0_9 = arith.constant 0 : index
    %c0_10 = arith.constant 0 : index
    %10 = vector.load %arg5[%c1, %c0_9, %c0_10] : memref<2x4x16xf32, #tpu.memory_space<vmem>>, vector<1x4x16xf32>
    %11 = vector.shape_cast %10 : vector<1x4x16xf32> to vector<4x16xf32>
    %cst_11 = arith.constant dense<0.000000e+00> : vector<8x16xf32>
    %12 = tpu.matmul %0, %11, %cst_11 {dimension_numbers = #tpu.dot_dimension_numbers<[1], [0], [0], [1], [0, 0, 1, 1], [], []>} : vector<8x4xf32>, vector<4x16xf32>, vector<8x16xf32> -> vector<8x16xf32>
    %13 = vector.broadcast %1 : vector<8x1xf32> to vector<8x16xf32>
    %14 = arith.addf %12, %13 : vector<8x16xf32>
    %c1_12 = arith.constant 1 : index
    %c0_13 = arith.constant 0 : index
    %c0_14 = arith.constant 0 : index
    %15 = vector.load %arg6[%c1_12, %c0_13, %c0_14] : memref<2x8x16xf32, #tpu.memory_space<vmem>>, vector<1x8x16xf32>
    %16 = vector.shape_cast %15 : vector<1x8x16xf32> to vector<8x16xf32>
    %17 = vector.shape_cast %14 : vector<8x16xf32> to vector<1x8x16xf32>
    tpu.vector_store %arg6[%c1_12, %c0_13, %c0_14], %17 {strides = array<i32>} : memref<2x8x16xf32, #tpu.memory_space<vmem>>, vector<1x8x16xf32>,
    return
  }
  func.func @transform_0(%arg0: i32, %arg1: i32, %arg2: i32) -> (i32, i32) {
    %c0_i32 = arith.constant 0 : i32
    %c0_i32_0 = arith.constant 0 : i32
    return %arg0, %c0_i32 : i32, i32
  }
  func.func @transform_1(%arg0: i32, %arg1: i32, %arg2: i32) -> (i32, i32) {
    %c0_i32 = arith.constant 0 : i32
    %c0_i32_0 = arith.constant 0 : i32
    return %arg0, %c0_i32 : i32, i32
  }
  func.func @transform_2(%arg0: i32, %arg1: i32, %arg2: i32) -> (i32, i32, i32) {
    %c0_i32 = arith.constant 0 : i32
    %c0_i32_0 = arith.constant 0 : i32
    return %arg1, %c0_i32, %arg2 : i32, i32, i32
  }
  func.func @transform_3(%arg0: i32, %arg1: i32, %arg2: i32) -> (i32, i32, i32) {
    %c0_i32 = arith.constant 0 : i32
    return %arg1, %arg0, %arg2 : i32, i32, i32
  }
}

</mosaic_0001>

<llo_original>
// kernel: tpu_custom_call.1
$region0: #{tpu_custom_call.1}
  #allocation0 [shape = 'u32[]', space=smem, size = 0x4, offset = 0x4, fixed_abs, tag = 'smem constant byte address 0x4 - core index']
  #allocation1 [shape = 'u32[144,128]{1,0:T(1,128)}', space=vmem, size = 0x12000, scoped, tag = 'internal scratch']
  %s0 = inlined_call_operand.vmem [shape: f32[8,4], index: 0, kind: input, shape index: {}]
  %s1 = inlined_call_operand.vmem [shape: f32[8,1], index: 1, kind: input, shape index: {}]
  %s2 = inlined_call_operand.vmem [shape: f32[2,4,16], index: 2, kind: input, shape index: {}]
  %s3 = inlined_call_operand.hbm [shape: f32[2,8,16], index: 3, kind: output, shape index: {}]
  %s4 = sld [smem:[#allocation0]]
  $region22: #{tpu_custom_call.1} parent=0
    _
  %s6 = ssub.s32 1, %s4
  %s7 = scalar_select 0, %s6, %s4
  $region1: #{tpu_custom_call.1} parent=0
    #allocation2 [shape = 'u8[8192]{0}', space=vmem, size = 0x2000, scoped, tag = 'output window, operand 0, single buffered']
    #allocation3 [shape = 's32[1]{0}', space=sflag, size = 0x4, scoped, tag = 'scoped memory for tpu_custom_call.1']
    %8 = vsyncpa [#allocation3], 0
    // Predicated region
    $region2: #{tpu_custom_call.1} parent=1 // pred_check
      _
    $region3: #{tpu_custom_call.1} parent=1 // pred_check_branch
      %10 = sbr.rel (0) target = $region5
    $region4: #{tpu_custom_call.1} parent=1 // pred_region
      _
    $region5: #{tpu_custom_call.1} parent=1 // pred_fallthru
      _
    // Predicated region
    $region6: #{tpu_custom_call.1} parent=1 // pred_check
      _
    $region7: #{tpu_custom_call.1} parent=1 // pred_check_branch
      %12 = sbr.rel (0) target = $region9
    $region8: #{tpu_custom_call.1} parent=1 // pred_region
      _
    $region9: #{tpu_custom_call.1} parent=1 // pred_fallthru
      _
    // Predicated region
    $region10: #{tpu_custom_call.1} parent=1 // pred_check
      _
    $region11: #{tpu_custom_call.1} parent=1 // pred_check_branch
      %14 = sbr.rel (0) target = $region13
    $region12: #{tpu_custom_call.1} parent=1 // pred_region
      _
    $region13: #{tpu_custom_call.1} parent=1 // pred_fallthru
      _
    %v15 = vld [vmem:[%s0] sm:$0xff]
    %v16 = vld [vmem:[%s1] sm:$0xff]
    %v17 = vld [vmem:[%s2] sm:$0xf]
    %19 = vset.pattern.permute.xlu0 0
    %20 = vperm.xlu0 %19, %v16
    %v21 = vpop.permute.xlu0 %20
    %vm23 = vcmask 31744
    %v25 = vsel %vm23, %v15, 0
    %vm27 = vcmask 1043456
    %v29 = vsel %vm27, %v17, 0
    %31 = vmatprep.subr.mxu0 0.0
    %32 = vmatpush1.msra.mxu0 %v29
    %33 = vmatprep.subr.mxu0 0.0
    %34 = vmatpush1.msra.mxu0 0.0
    %35 = vmatprep.subr.mxu0 0.0
    %36 = vmatpush1.msra.mxu0 0.0
    %37 = vmatprep.subr.mxu0 0.0
    %38 = vmatpush1.msra.mxu0 0.0
    %39 = vmatprep.subr.mxu0 0.0
    %40 = vmatpush1.msra.mxu0 0.0
    %41 = vmatprep.subr.mxu0 0.0
    %42 = vmatpush1.msra.mxu0 0.0
    %43 = vmatprep.subr.mxu0 0.0
    %44 = vmatpush1.msra.mxu0 0.0
    %45 = vmatprep.subr.mxu0 0.0
    %46 = vmatpush1.msra.mxu0 0.0
    %47 = vmatprep.subr.mxu0 0.0
    %48 = vmatpush1.msra.mxu0 0.0
    %49 = vmatprep.subr.mxu0 0.0
    %50 = vmatpush1.msra.mxu0 0.0
    %51 = vmatprep.subr.mxu0 0.0
    %52 = vmatpush1.msra.mxu0 0.0
    %53 = vmatprep.subr.mxu0 0.0
    %54 = vmatpush1.msra.mxu0 0.0
    %55 = vmatprep.subr.mxu0 0.0
    %56 = vmatpush1.msra.mxu0 0.0
    %57 = vmatprep.subr.mxu0 0.0
    %58 = vmatpush1.msra.mxu0 0.0
    %59 = vmatprep.subr.mxu0 0.0
    %60 = vmatpush1.msra.mxu0 0.0
    %61 = vmatprep.subr.mxu0 0.0
    %62 = vmatpush1.msra.mxu0 0.0
    %63 = vmatprep.subr.mxu0 0.0
    %64 = vmatpush1.msra.mxu0 0.0
    %65 = vmatprep.subr.mxu0 0.0
    %66 = vmatpush1.msra.mxu0 0.0
    %67 = vmatprep.subr.mxu0 0.0
    %68 = vmatpush1.msra.mxu0 0.0
    %69 = vmatprep.subr.mxu0 0.0
    %70 = vmatpush1.msra.mxu0 0.0
    %71 = vmatprep.subr.mxu0 0.0
    %72 = vmatpush1.msra.mxu0 0.0
    %73 = vmatprep.subr.mxu0 0.0
    %74 = vmatpush1.msra.mxu0 0.0
    %75 = vmatprep.subr.mxu0 0.0
    %76 = vmatpush1.msra.mxu0 0.0
    %77 = vmatprep.subr.mxu0 0.0
    %78 = vmatpush1.msra.mxu0 0.0
    %79 = vmatprep.subr.mxu0 0.0
    %80 = vmatpush1.msra.mxu0 0.0
    %81 = vmatprep.subr.mxu0 0.0
    %82 = vmatpush1.msra.mxu0 0.0
    %83 = vmatprep.subr.mxu0 0.0
    %84 = vmatpush1.msra.mxu0 0.0
    %85 = vmatprep.subr.mxu0 0.0
    %86 = vmatpush1.msra.mxu0 0.0
    %87 = vmatprep.subr.mxu0 0.0
    %88 = vmatpush1.msra.mxu0 0.0
    %89 = vmatprep.subr.mxu0 0.0
    %90 = vmatpush1.msra.mxu0 0.0
    %91 = vmatprep.subr.mxu0 0.0
    %92 = vmatpush1.msra.mxu0 0.0
    %93 = vmatprep.subr.mxu0 0.0
    %94 = vmatpush1.msra.mxu0 0.0
    %95 = vmatprep.mubr.f32.mxu0 0.0
    %96 = vmatmul.mubr.f32.gmra.mrb[0].mxu0 %v25
    %v97 = vpop.f32.mrb[0].mxu0
    %v98 = vadd.f32 %v21, %v97
    %v99 = vpop.f32.mrb[0].mxu0
    %100 = vdwg.mxu0
    %vm101 = vcmask 130048
    %102 = vst.msk [vmem:[#allocation2] sm:$0xff] %vm101, %v98
    %s103 = scalar_lea.vmem %s2, 4
    %v104 = vld [vmem:[%s103] sm:$0xf]
    %v106 = vsel %vm27, %v104, 0
    %108 = vmatprep.subr.mxu0 0.0
    %109 = vmatpush1.msra.mxu0 %v106
    %110 = vmatprep.subr.mxu0 0.0
    %111 = vmatpush1.msra.mxu0 0.0
    %112 = vmatprep.subr.mxu0 0.0
    %113 = vmatpush1.msra.mxu0 0.0
    %114 = vmatprep.subr.mxu0 0.0
    %115 = vmatpush1.msra.mxu0 0.0
    %116 = vmatprep.subr.mxu0 0.0
    %117 = vmatpush1.msra.mxu0 0.0
    %118 = vmatprep.subr.mxu0 0.0
    %119 = vmatpush1.msra.mxu0 0.0
    %120 = vmatprep.subr.mxu0 0.0
    %121 = vmatpush1.msra.mxu0 0.0
    %122 = vmatprep.subr.mxu0 0.0
    %123 = vmatpush1.msra.mxu0 0.0
    %124 = vmatprep.subr.mxu0 0.0
    %125 = vmatpush1.msra.mxu0 0.0
    %126 = vmatprep.subr.mxu0 0.0
    %127 = vmatpush1.msra.mxu0 0.0
    %128 = vmatprep.subr.mxu0 0.0
    %129 = vmatpush1.msra.mxu0 0.0
    %130 = vmatprep.subr.mxu0 0.0
    %131 = vmatpush1.msra.mxu0 0.0
    %132 = vmatprep.subr.mxu0 0.0
    %133 = vmatpush1.msra.mxu0 0.0
    %134 = vmatprep.subr.mxu0 0.0
    %135 = vmatpush1.msra.mxu0 0.0
    %136 = vmatprep.subr.mxu0 0.0
    %137 = vmatpush1.msra.mxu0 0.0
    %138 = vmatprep.subr.mxu0 0.0
    %139 = vmatpush1.msra.mxu0 0.0
    %140 = vmatprep.subr.mxu0 0.0
    %141 = vmatpush1.msra.mxu0 0.0
    %142 = vmatprep.subr.mxu0 0.0
    %143 = vmatpush1.msra.mxu0 0.0
    %144 = vmatprep.subr.mxu0 0.0
    %145 = vmatpush1.msra.mxu0 0.0
    %146 = vmatprep.subr.mxu0 0.0
    %147 = vmatpush1.msra.mxu0 0.0
    %148 = vmatprep.subr.mxu0 0.0
    %149 = vmatpush1.msra.mxu0 0.0
    %150 = vmatprep.subr.mxu0 0.0
    %151 = vmatpush1.msra.mxu0 0.0
    %152 = vmatprep.subr.mxu0 0.0
    %153 = vmatpush1.msra.mxu0 0.0
    %154 = vmatprep.subr.mxu0 0.0
    %155 = vmatpush1.msra.mxu0 0.0
    %156 = vmatprep.subr.mxu0 0.0
    %157 = vmatpush1.msra.mxu0 0.0
    %158 = vmatprep.subr.mxu0 0.0
    %159 = vmatpush1.msra.mxu0 0.0
    %160 = vmatprep.subr.mxu0 0.0
    %161 = vmatpush1.msra.mxu0 0.0
    %162 = vmatprep.subr.mxu0 0.0
    %163 = vmatpush1.msra.mxu0 0.0
    %164 = vmatprep.subr.mxu0 0.0
    %165 = vmatpush1.msra.mxu0 0.0
    %166 = vmatprep.subr.mxu0 0.0
    %167 = vmatpush1.msra.mxu0 0.0
    %168 = vmatprep.subr.mxu0 0.0
    %169 = vmatpush1.msra.mxu0 0.0
    %170 = vmatprep.subr.mxu0 0.0
    %171 = vmatpush1.msra.mxu0 0.0
    %172 = vmatprep.mubr.f32.mxu0 0.0
    %173 = vmatmul.mubr.f32.gmra.mrb[0].mxu0 %v25
    %v174 = vpop.f32.mrb[0].mxu0
    %v175 = vadd.f32 %v21, %v174
    %v176 = vpop.f32.mrb[0].mxu0
    %177 = vdwg.mxu0
    %s178 = scalar_lea.vmem [#allocation2], 8
    %179 = vst.msk [vmem:[%s178] sm:$0xff] %vm101, %v175
    // Predicated region
    $region14: #{tpu_custom_call.1} parent=1 // pred_check
      _
    $region15: #{tpu_custom_call.1} parent=1 // pred_check_branch
      %181 = sbr.rel (0) target = $region17
    $region16: #{tpu_custom_call.1} parent=1 // pred_region
      %s183 = ssub.s32 256, 256
      %184 = vsyncadd [#allocation3], %s183
      %s185 = sshll.u32 [#allocation2], 4
      %s186 = int_to_ptr.vmem [resolvable:$true] %s185
      %191 = dma.vmem_to_hbm [thread:$0]  %s186, 256, %s3, [#allocation3], 128, 128, 8
    $region17: #{tpu_custom_call.1} parent=1 // pred_fallthru
      _
    // Predicated region
    $region18: #{tpu_custom_call.1} parent=1 // pred_check
      _
    $region19: #{tpu_custom_call.1} parent=1 // pred_check_branch
      %193 = sbr.rel (0) target = $region21
    $region20: #{tpu_custom_call.1} parent=1 // pred_region
      %194 = dma.done [#allocation3], 256
    $region21: #{tpu_custom_call.1} parent=1 // pred_fallthru
      _
    %195 = vsyncpa [#allocation3], 1

</llo_original>
